<compile_context>
chip_gen: v5e
topology: v5e:2x2
jax: 0.10.0
libtpu: 0.0.40
codegen_flags: <defaults>
</compile_context>

<pallas_src>
import numpy as np
import jax
import jax.numpy as jnp
from jax.experimental import pallas as pl
from jax.experimental.pallas import tpu as pltpu

# ----- small, module-consistent sizes -----
B = 2          # batch
N = 8          # sequence length
DIM = 32       # model dim
HEADS = 4
DIM_HEAD = 16
INNER = HEADS * DIM_HEAD          # 64
SCALE = DIM_HEAD ** (-0.5)

# Head block-indicator matrices, built once on the host:
#   S  [INNER, HEADS] : S[i, h] = 1 if i // DIM_HEAD == h   (contract dim_head per head)
#   S_T[HEADS, INNER] : transpose                            (expand per-head scalar over dim_head)
_S_NP = (np.arange(INNER)[:, None] // DIM_HEAD
         == np.arange(HEADS)[None, :]).astype(np.float32)
_ST_NP = np.ascontiguousarray(_S_NP.T)


def lc_attention_kernel(x_ref, wkv_ref, wq_ref, wout_ref, bout_ref,
                        s_ref, st_ref, o_ref):
    # x_ref   : (B, N, DIM)       activations (whole array in VMEM)
    # wkv_ref : (DIM, 2*INNER)    fused [K | V] projection weight
    # wq_ref  : (DIM, INNER)      Q projection weight, PRE-SCALED by dim_head**-0.5
    # wout_ref: (INNER, DIM)      output projection weight
    # bout_ref: (1, DIM)          output projection bias
    # s_ref   : (INNER, HEADS)    head indicator        st_ref: (HEADS, INNER)
    # o_ref   : (B, DIM)          lane-dense output slab (seq axis re-added in wrapper)
    x3 = x_ref[...]                                              # (B, N, DIM)
    x_flat = x3.reshape(B * N, DIM)                              # sublane merge (N == 8)
    x_last = x3[:, N - 1:N, :].reshape(B, DIM)                   # last token of each batch

    # K,V for every row: one (16,32)@(32,128) MXU matmul -> single unmasked 128-lane tile.
    kv = jnp.dot(x_flat, wkv_ref[...], preferred_element_type=jnp.float32)   # (B*N, 2*INNER)
    # Q only for the last tokens (scale already folded into wq).
    q_last = jnp.dot(x_last, wq_ref[...], preferred_element_type=jnp.float32)  # (B, INNER)

    k3 = kv[:, :INNER].reshape(B, N, INNER)                      # (B, N, INNER)
    v3 = kv[:, INNER:].reshape(B, N, INNER)                      # (B, N, INNER)

    S = s_ref[...]                                               # (INNER, HEADS)
    S_T = st_ref[...]                                            # (HEADS, INNER)

    # Per-head scores without a head loop:
    #   dots[b, n, h] = sum_d q_last[b, h*dh+d] * k[b, n, h*dh+d]
    mixed = k3 * q_last[:, None, :]                              # (B, N, INNER)  VPU
    dots = jnp.dot(mixed.reshape(B * N, INNER), S,
                   preferred_element_type=jnp.float32).reshape(B, N, HEADS)

    # Numerically stable softmax over the key axis, all heads at once.
    m = jnp.max(dots, axis=1, keepdims=True)                     # (B, 1, HEADS)
    e = jnp.exp(dots - m)                                        # (B, N, HEADS)  EUP
    denom = jnp.sum(e, axis=1, keepdims=True)                    # (B, 1, HEADS)

    # Deferred normalization: run the AV path on the UN-normalized e so the S_T
    # expansion matmul starts as soon as e is ready (overlaps with denom/recip).
    e_exp = jnp.dot(e.reshape(B * N, HEADS), S_T,
                    preferred_element_type=jnp.float32).reshape(B, N, INNER)
    out_unnorm = jnp.sum(e_exp * v3, axis=1)                     # (B, INNER)

    # Exact per-head reciprocal (only B*HEADS = 8 values; tighter than approx EUP),
    # expanded over dim_head with the same S_T matmul.
    inv = (1.0 / denom).reshape(B, HEADS)                        # (B, HEADS)
    inv_exp = jnp.dot(inv, S_T, preferred_element_type=jnp.float32)   # (B, INNER)
    out_inner = out_unnorm * inv_exp                             # (B, INNER)

    # Output projection Linear(INNER, DIM) with bias.
    out = jnp.dot(out_inner, wout_ref[...],
                  preferred_element_type=jnp.float32) + bout_ref[...]  # (B, DIM)
    o_ref[...] = out.astype(o_ref.dtype)


def prepare_params(w_qkv, w_out, b_out):
    """Parameter prep (done ONCE, outside the hot path).

    w_qkv: (DIM, 3*INNER) unscaled fused weight, columns ordered [Q | K | V]
           (i.e. PyTorch's to_qkv.weight.T).
    Returns (w_kv, w_q_scaled, w_out, b_out_2d, S, S_T) ready for the kernel.
    The attention scale dim_head**-0.5 is folded into the Q weight here, so the
    kernel contract is explicit: it expects the PRE-SCALED Q weight.
    """
    w_q_scaled = w_qkv[:, :INNER] * jnp.float32(SCALE)           # (DIM, INNER)
    w_kv = w_qkv[:, INNER:]                                      # (DIM, 2*INNER)
    return (w_kv, w_q_scaled, w_out, b_out.reshape(1, DIM),
            jnp.asarray(_S_NP), jnp.asarray(_ST_NP))


def lc_attention(x, params):
    """x: (B, N, DIM); params from prepare_params. Returns (B, 1, DIM)."""
    b, n, d = x.shape
    w_kv, w_q_scaled, w_out, b_out2, s_mat, st_mat = params
    out = pl.pallas_call(
        lc_attention_kernel,
        out_shape=jax.ShapeDtypeStruct((b, d), x.dtype),
        in_specs=[pl.BlockSpec(memory_space=pltpu.MemorySpace.VMEM)] * 7,
        out_specs=pl.BlockSpec(memory_space=pltpu.MemorySpace.VMEM),
    )(x, w_kv, w_q_scaled, w_out, b_out2, s_mat, st_mat)
    return out.reshape(b, 1, d)


def reference_forward(x, w_qkv, w_out, b_out):
    # Pure-JAX mirror of the PyTorch module's forward (unscaled weights).
    b, n, _ = x.shape
    qkv = x @ w_qkv                                              # (B, N, 3*INNER)
    q, k, v = jnp.split(qkv, 3, axis=-1)

    def rearr(t):  # 'b n (h d) -> b h n d'
        return t.reshape(b, n, HEADS, DIM_HEAD).transpose(0, 2, 1, 3)

    q, k, v = map(rearr, (q, k, v))
    q = q[:, :, -1:, :]                                          # (B, H, 1, dh)
    dots = jnp.einsum('bhid,bhjd->bhij', q, k) * SCALE
    attn = jax.nn.softmax(dots, axis=-1)
    out = jnp.einsum('bhij,bhjd->bhid', attn, v)
    out = out.transpose(0, 2, 1, 3).reshape(b, 1, INNER)         # 'b h n d -> b n (h d)'
    return out @ w_out + b_out[None]                             # (B, 1, DIM)


if __name__ == "__main__":
    key = jax.random.PRNGKey(0)
    kx, kq, ko, kb = jax.random.split(key, 4)

    x = jax.random.normal(kx, (B, N, DIM), dtype=jnp.float32)

    # Deterministic parameter init (Linear weights stored as (in, out)).
    w_qkv = jax.random.normal(kq, (DIM, 3 * INNER), dtype=jnp.float32) * 0.05
    w_out = jax.random.normal(ko, (INNER, DIM), dtype=jnp.float32) * 0.05
    b_out = jax.random.normal(kb, (DIM,), dtype=jnp.float32) * 0.05

    params = prepare_params(w_qkv, w_out, b_out)

    out = lc_attention(x, params)
    out = jax.block_until_ready(out)

    ref = reference_forward(x, w_qkv, w_out, b_out)
    assert out.shape == (B, 1, DIM), out.shape
    # Exact f32 math throughout (no approx reciprocal) -> tight tolerance.
    assert jnp.allclose(out, ref, atol=2e-4, rtol=2e-4), float(jnp.max(jnp.abs(out - ref)))

    print("KERNEL_OK")
</pallas_src>

<mosaic_0001>
module attributes {stable_mosaic.version = 11 : i64} {
  func.func @lc_attention_kernel(%arg0: memref<2x8x32xf32, #tpu.memory_space<vmem>>, %arg1: memref<32x128xf32, #tpu.memory_space<vmem>>, %arg2: memref<32x64xf32, #tpu.memory_space<vmem>>, %arg3: memref<64x32xf32, #tpu.memory_space<vmem>>, %arg4: memref<1x32xf32, #tpu.memory_space<vmem>>, %arg5: memref<64x4xf32, #tpu.memory_space<vmem>>, %arg6: memref<4x64xf32, #tpu.memory_space<vmem>>, %arg7: memref<2x32xf32, #tpu.memory_space<vmem>>) attributes {dimension_semantics = [], scalar_prefetch = 0 : i64, scratch_operands = 0 : i64, tpu.core_type = #tpu.core_type<tc>} {
    %c0 = arith.constant 0 : index
    %c0_0 = arith.constant 0 : index
    %c0_1 = arith.constant 0 : index
    %0 = vector.load %arg0[%c0, %c0_0, %c0_1] : memref<2x8x32xf32, #tpu.memory_space<vmem>>, vector<2x8x32xf32>
    %1 = vector.shape_cast %0 : vector<2x8x32xf32> to vector<16x32xf32>
    %2 = vector.extract_strided_slice %0 {offsets = [0, 7, 0], sizes = [2, 1, 32], strides = [1, 1, 1]} : vector<2x8x32xf32> to vector<2x1x32xf32>
    %3 = vector.shape_cast %2 : vector<2x1x32xf32> to vector<2x32xf32>
    %c0_2 = arith.constant 0 : index
    %c0_3 = arith.constant 0 : index
    %4 = vector.load %arg1[%c0_2, %c0_3] : memref<32x128xf32, #tpu.memory_space<vmem>>, vector<32x128xf32>
    %cst = arith.constant dense<0.000000e+00> : vector<16x128xf32>
    %5 = tpu.matmul %1, %4, %cst {dimension_numbers = #tpu.dot_dimension_numbers<[1], [0], [0], [1], [0, 0, 1, 1], [], []>} : vector<16x32xf32>, vector<32x128xf32>, vector<16x128xf32> -> vector<16x128xf32>
    %c0_4 = arith.constant 0 : index
    %c0_5 = arith.constant 0 : index
    %6 = vector.load %arg2[%c0_4, %c0_5] : memref<32x64xf32, #tpu.memory_space<vmem>>, vector<32x64xf32>
    %cst_6 = arith.constant dense<0.000000e+00> : vector<2x64xf32>
    %7 = tpu.matmul %3, %6, %cst_6 {dimension_numbers = #tpu.dot_dimension_numbers<[1], [0], [0], [1], [0, 0, 1, 1], [], []>} : vector<2x32xf32>, vector<32x64xf32>, vector<2x64xf32> -> vector<2x64xf32>
    %8 = vector.extract_strided_slice %5 {offsets = [0, 0], sizes = [16, 64], strides = [1, 1]} : vector<16x128xf32> to vector<16x64xf32>
    %9 = vector.shape_cast %8 : vector<16x64xf32> to vector<2x8x64xf32>
    %10 = vector.extract_strided_slice %5 {offsets = [0, 64], sizes = [16, 64], strides = [1, 1]} : vector<16x128xf32> to vector<16x64xf32>
    %11 = vector.shape_cast %10 : vector<16x64xf32> to vector<2x8x64xf32>
    %c0_7 = arith.constant 0 : index
    %c0_8 = arith.constant 0 : index
    %12 = vector.load %arg5[%c0_7, %c0_8] : memref<64x4xf32, #tpu.memory_space<vmem>>, vector<64x4xf32>
    %c0_9 = arith.constant 0 : index
    %c0_10 = arith.constant 0 : index
    %13 = vector.load %arg6[%c0_9, %c0_10] : memref<4x64xf32, #tpu.memory_space<vmem>>, vector<4x64xf32>
    %14 = vector.shape_cast %7 : vector<2x64xf32> to vector<2x1x64xf32>
    %15 = vector.broadcast %14 : vector<2x1x64xf32> to vector<2x8x64xf32>
    %16 = arith.mulf %9, %15 : vector<2x8x64xf32>
    %17 = vector.shape_cast %16 : vector<2x8x64xf32> to vector<16x64xf32>
    %cst_11 = arith.constant dense<0.000000e+00> : vector<16x4xf32>
    %18 = tpu.matmul %17, %12, %cst_11 {dimension_numbers = #tpu.dot_dimension_numbers<[1], [0], [0], [1], [0, 0, 1, 1], [], []>} : vector<16x64xf32>, vector<64x4xf32>, vector<16x4xf32> -> vector<16x4xf32>
    %19 = vector.shape_cast %18 : vector<16x4xf32> to vector<2x8x4xf32>
    %cst_12 = arith.constant dense<0xFF800000> : vector<2x4xf32>
    %20 = vector.multi_reduction <maximumf>, %19, %cst_12 [1] : vector<2x8x4xf32> to vector<2x4xf32>
    %21 = vector.shape_cast %20 : vector<2x4xf32> to vector<2x1x4xf32>
    %22 = vector.broadcast %21 : vector<2x1x4xf32> to vector<2x8x4xf32>
    %23 = arith.subf %19, %22 : vector<2x8x4xf32>
    %24 = math.exp %23 : vector<2x8x4xf32>
    %cst_13 = arith.constant dense<0.000000e+00> : vector<2x4xf32>
    %25 = vector.multi_reduction <add>, %24, %cst_13 [1] : vector<2x8x4xf32> to vector<2x4xf32>
    %26 = vector.shape_cast %25 : vector<2x4xf32> to vector<2x1x4xf32>
    %27 = vector.shape_cast %24 : vector<2x8x4xf32> to vector<16x4xf32>
    %cst_14 = arith.constant dense<0.000000e+00> : vector<16x64xf32>
    %28 = tpu.matmul %27, %13, %cst_14 {dimension_numbers = #tpu.dot_dimension_numbers<[1], [0], [0], [1], [0, 0, 1, 1], [], []>} : vector<16x4xf32>, vector<4x64xf32>, vector<16x64xf32> -> vector<16x64xf32>
    %29 = vector.shape_cast %28 : vector<16x64xf32> to vector<2x8x64xf32>
    %30 = arith.mulf %29, %11 : vector<2x8x64xf32>
    %cst_15 = arith.constant dense<0.000000e+00> : vector<2x64xf32>
    %31 = vector.multi_reduction <add>, %30, %cst_15 [1] : vector<2x8x64xf32> to vector<2x64xf32>
    %cst_16 = arith.constant 1.000000e+00 : f32
    %32 = vector.broadcast %cst_16 : f32 to vector<2x1x4xf32>
    %33 = arith.divf %32, %26 : vector<2x1x4xf32>
    %34 = vector.shape_cast %33 : vector<2x1x4xf32> to vector<2x4xf32>
    %cst_17 = arith.constant dense<0.000000e+00> : vector<2x64xf32>
    %35 = tpu.matmul %34, %13, %cst_17 {dimension_numbers = #tpu.dot_dimension_numbers<[1], [0], [0], [1], [0, 0, 1, 1], [], []>} : vector<2x4xf32>, vector<4x64xf32>, vector<2x64xf32> -> vector<2x64xf32>
    %36 = arith.mulf %31, %35 : vector<2x64xf32>
    %c0_18 = arith.constant 0 : index
    %c0_19 = arith.constant 0 : index
    %37 = vector.load %arg3[%c0_18, %c0_19] : memref<64x32xf32, #tpu.memory_space<vmem>>, vector<64x32xf32>
    %cst_20 = arith.constant dense<0.000000e+00> : vector<2x32xf32>
    %38 = tpu.matmul %36, %37, %cst_20 {dimension_numbers = #tpu.dot_dimension_numbers<[1], [0], [0], [1], [0, 0, 1, 1], [], []>} : vector<2x64xf32>, vector<64x32xf32>, vector<2x32xf32> -> vector<2x32xf32>
    %c0_21 = arith.constant 0 : index
    %c0_22 = arith.constant 0 : index
    %39 = vector.load %arg4[%c0_21, %c0_22] : memref<1x32xf32, #tpu.memory_space<vmem>>, vector<1x32xf32>
    %40 = vector.broadcast %39 : vector<1x32xf32> to vector<2x32xf32>
    %41 = arith.addf %38, %40 : vector<2x32xf32>
    %c0_23 = arith.constant 0 : index
    %c0_24 = arith.constant 0 : index
    %42 = vector.load %arg7[%c0_23, %c0_24] : memref<2x32xf32, #tpu.memory_space<vmem>>, vector<2x32xf32>
    tpu.vector_store %arg7[%c0_23, %c0_24], %41 {strides = array<i32>} : memref<2x32xf32, #tpu.memory_space<vmem>>, vector<2x32xf32>,
    return
  }
}

</mosaic_0001>

<llo_original>
// kernel: tpu_custom_call.1
$region0: #{tpu_custom_call.1}
  #allocation0 [shape = 'u32[]', space=smem, size = 0x4, offset = 0x4, fixed_abs, tag = 'smem constant byte address 0x4 - core index']
  #allocation1 [shape = 'u32[72,128]{1,0:T(1,128)}', space=vmem, size = 0x9000, scoped, tag = 'internal scratch']
  %s0 = inlined_call_operand.vmem [shape: f32[2,8,32], index: 0, kind: input, shape index: {}]
  %s1 = inlined_call_operand.vmem [shape: f32[32,128], index: 1, kind: input, shape index: {}]
  %s2 = inlined_call_operand.vmem [shape: f32[32,64], index: 2, kind: input, shape index: {}]
  %s3 = inlined_call_operand.vmem [shape: f32[64,32], index: 3, kind: input, shape index: {}]
  %s4 = inlined_call_operand.vmem [shape: f32[1,32], index: 4, kind: input, shape index: {}]
  %s5 = inlined_call_operand.vmem [shape: f32[64,4], index: 5, kind: input, shape index: {}]
  %s6 = inlined_call_operand.vmem [shape: f32[4,64], index: 6, kind: input, shape index: {}]
  %s7 = inlined_call_operand.hbm [shape: f32[2,32], index: 7, kind: output, shape index: {}]
  %s8 = sld [smem:[#allocation0]]
  $region38: #{tpu_custom_call.1} parent=0
    _
  %s10 = ssub.s32 1, %s8
  %s11 = scalar_select 0, %s10, %s8
  $region1: #{tpu_custom_call.1} parent=0
    #allocation2 [shape = 'u8[1024]{0}', space=vmem, size = 0x400, scoped, tag = 'output window, operand 0, single buffered']
    #allocation3 [shape = 's32[1]{0}', space=sflag, size = 0x4, scoped, tag = 'scoped memory for tpu_custom_call.1']
    %12 = vsyncpa [#allocation3], 0
    // Predicated region
    $region2: #{tpu_custom_call.1} parent=1 // pred_check
      _
    $region3: #{tpu_custom_call.1} parent=1 // pred_check_branch
      %14 = sbr.rel (0) target = $region5
    $region4: #{tpu_custom_call.1} parent=1 // pred_region
      _
    $region5: #{tpu_custom_call.1} parent=1 // pred_fallthru
      _
    // Predicated region
    $region6: #{tpu_custom_call.1} parent=1 // pred_check
      _
    $region7: #{tpu_custom_call.1} parent=1 // pred_check_branch
      %16 = sbr.rel (0) target = $region9
    $region8: #{tpu_custom_call.1} parent=1 // pred_region
      _
    $region9: #{tpu_custom_call.1} parent=1 // pred_fallthru
      _
    // Predicated region
    $region10: #{tpu_custom_call.1} parent=1 // pred_check
      _
    $region11: #{tpu_custom_call.1} parent=1 // pred_check_branch
      %18 = sbr.rel (0) target = $region13
    $region12: #{tpu_custom_call.1} parent=1 // pred_region
      _
    $region13: #{tpu_custom_call.1} parent=1 // pred_fallthru
      _
    // Predicated region
    $region14: #{tpu_custom_call.1} parent=1 // pred_check
      _
    $region15: #{tpu_custom_call.1} parent=1 // pred_check_branch
      %20 = sbr.rel (0) target = $region17
    $region16: #{tpu_custom_call.1} parent=1 // pred_region
      _
    $region17: #{tpu_custom_call.1} parent=1 // pred_fallthru
      _
    // Predicated region
    $region18: #{tpu_custom_call.1} parent=1 // pred_check
      _
    $region19: #{tpu_custom_call.1} parent=1 // pred_check_branch
      %22 = sbr.rel (0) target = $region21
    $region20: #{tpu_custom_call.1} parent=1 // pred_region
      _
    $region21: #{tpu_custom_call.1} parent=1 // pred_fallthru
      _
    // Predicated region
    $region22: #{tpu_custom_call.1} parent=1 // pred_check
      _
    $region23: #{tpu_custom_call.1} parent=1 // pred_check_branch
      %24 = sbr.rel (0) target = $region25
    $region24: #{tpu_custom_call.1} parent=1 // pred_region
      _
    $region25: #{tpu_custom_call.1} parent=1 // pred_fallthru
      _
    // Predicated region
    $region26: #{tpu_custom_call.1} parent=1 // pred_check
      _
    $region27: #{tpu_custom_call.1} parent=1 // pred_check_branch
      %26 = sbr.rel (0) target = $region29
    $region28: #{tpu_custom_call.1} parent=1 // pred_region
      _
    $region29: #{tpu_custom_call.1} parent=1 // pred_fallthru
      _
    %v27 = vld [vmem:[%s0] sm:$0xff]
    %v28 = vld [vmem:[%s0 + $0x8] sm:$0xff]
    %v29 = vld [vmem:[%s1] sm:$0xff]
    %v30 = vld [vmem:[%s1 + $0x8] sm:$0xff]
    %v31 = vld [vmem:[%s1 + $0x10] sm:$0xff]
    %v32 = vld [vmem:[%s1 + $0x18] sm:$0xff]
    %vm33 = vcmask 261120
    %v35 = vsel %vm33, %v27, 0
    %v38 = vsel %vm33, %v28, 0
    %40 = vmatpush.msra.mxu0 0.0
    %41 = vmatpush.msra.mxu0 0.0
    %42 = vmatpush.msra.mxu0 0.0
    %43 = vmatpush.msra.mxu0 0.0
    %44 = vmatpush.msra.mxu0 0.0
    %45 = vmatpush.msra.mxu0 0.0
    %46 = vmatpush.msra.mxu0 0.0
    %47 = vmatpush.msra.mxu0 0.0
    %48 = vmatpush.msra.mxu0 0.0
    %49 = vmatpush.msra.mxu0 0.0
    %50 = vmatpush.msra.mxu0 0.0
    %51 = vmatpush.msra.mxu0 0.0
    %52 = vmatpush.msra.mxu0 %v32
    %53 = vmatpush.msra.mxu0 %v31
    %54 = vmatpush.msra.mxu0 %v30
    %55 = vmatpush.msra.mxu0 %v29
    %56 = vmatmul.f32.gmra.mxu0 %v35
    %v57 = vpop.f32.mrf.mxu0
    %v58 = vadd.f32 0.0, %v57
    %59 = vmatmul.f32.gmra.mxu0 %v38
    %v60 = vpop.f32.mrf.mxu0
    %v61 = vadd.f32 0.0, %v60
    %62 = vdwg.mxu0
    %v63 = vld [vmem:[%s2] sm:$0xff]
    %v64 = vld [vmem:[%s2 + $0x8] sm:$0xff]
    %v65 = vld [vmem:[%s2 + $0x10] sm:$0xff]
    %v66 = vld [vmem:[%s2 + $0x18] sm:$0xff]
    %v67 = vrot.slane %v27, 7
    %v68 = vrot.slane %v28, 6
    %vm69 = vcmask 1041409
    %v70 = vsel %vm69, %v68, %v67
    %v71 = vsel %vm33, %v70, 0
    %73 = vmatpush.msra.mxu0 0.0
    %74 = vmatpush.msra.mxu0 0.0
    %75 = vmatpush.msra.mxu0 0.0
    %76 = vmatpush.msra.mxu0 0.0
    %77 = vmatpush.msra.mxu0 0.0
    %78 = vmatpush.msra.mxu0 0.0
    %79 = vmatpush.msra.mxu0 0.0
    %80 = vmatpush.msra.mxu0 0.0
    %81 = vmatpush.msra.mxu0 0.0
    %82 = vmatpush.msra.mxu0 0.0
    %83 = vmatpush.msra.mxu0 0.0
    %84 = vmatpush.msra.mxu0 0.0
    %85 = vmatpush.msra.mxu0 %v66
    %86 = vmatpush.msra.mxu0 %v65
    %87 = vmatpush.msra.mxu0 %v64
    %88 = vmatpush.msra.mxu0 %v63
    %89 = vmatmul.f32.gmra.mxu0 %v71
    %v90 = vpop.f32.mrf.mxu0
    %v91 = vadd.f32 0.0, %v90
    %92 = vdwg.mxu0
    %v93 = vld [vmem:[%s5] sm:$0xff]
    %v94 = vld [vmem:[%s5 + $0x8] sm:$0xff]
    %v95 = vld [vmem:[%s5 + $0x10] sm:$0xff]
    %v96 = vld [vmem:[%s5 + $0x18] sm:$0xff]
    %v97 = vld [vmem:[%s5 + $0x20] sm:$0xff]
    %v98 = vld [vmem:[%s5 + $0x28] sm:$0xff]
    %v99 = vld [vmem:[%s5 + $0x30] sm:$0xff]
    %v100 = vld [vmem:[%s5 + $0x38] sm:$0xff]
    %v101 = vld [vmem:[%s6] sm:$0xf]
    %v103 = vrot.slane %v91, 1
    %v104 = vperm.slane %v91, 0
    %v105 = vperm.slane %v103, 0
    %v108 = vmul.f32 %v58, %v104
    %v109 = vmul.f32 %v61, %v105
    %vm110 = vcmask 523264
    %v112 = vsel %vm110, %v108, 0
    %v115 = vsel %vm110, %v109, 0
    %117 = vmatpush.msra.mxu0 0.0
    %118 = vmatpush.msra.mxu0 0.0
    %119 = vmatpush.msra.mxu0 0.0
    %120 = vmatpush.msra.mxu0 0.0
    %121 = vmatpush.msra.mxu0 0.0
    %122 = vmatpush.msra.mxu0 0.0
    %123 = vmatpush.msra.mxu0 0.0
    %124 = vmatpush.msra.mxu0 0.0
    %125 = vmatpush.msra.mxu0 %v100
    %126 = vmatpush.msra.mxu0 %v99
    %127 = vmatpush.msra.mxu0 %v98
    %128 = vmatpush.msra.mxu0 %v97
    %129 = vmatpush.msra.mxu0 %v96
    %130 = vmatpush.msra.mxu0 %v95
    %131 = vmatpush.msra.mxu0 %v94
    %132 = vmatpush.msra.mxu0 %v93
    %133 = vmatmul.f32.gmra.mxu0 %v112
    %v134 = vpop.f32.mrf.mxu0
    %v135 = vadd.f32 0.0, %v134
    %136 = vmatmul.f32.gmra.mxu0 %v115
    %v137 = vpop.f32.mrf.mxu0
    %v138 = vadd.f32 0.0, %v137
    %139 = vdwg.mxu0
    %vm140 = vcmask 31744
    %v141 = vsel %vm140, %v135, -inf
    %v142 = vrot.slane %v141, 4
    %v143 = vmax.f32 %v141, %v142
    %v144 = vrot.slane %v143, 2
    %v145 = vmax.f32 %v143, %v144
    %v146 = vrot.slane %v145, 1
    %v147 = vmax.f32 %v145, %v146
    %v148 = vsel %vm140, %v138, -inf
    %v149 = vrot.slane %v148, 4
    %v150 = vmax.f32 %v148, %v149
    %v151 = vrot.slane %v150, 2
    %v152 = vmax.f32 %v150, %v151
    %v153 = vrot.slane %v152, 1
    %v154 = vmax.f32 %v152, %v153
    %v155 = vsub.f32 %v135, %v147
    %v156 = vsub.f32 %v138, %v154
    %v157 = vmul.f32 %v155, 1.442695
    %v158 = vpow.pop %v157
    %v159 = vmul.f32 %v156, 1.442695
    %v160 = vpow.pop %v159
    %v161 = vsel %vm140, %v158, 0.0
    %v162 = vrot.slane %v161, 4
    %v163 = vadd.f32 %v161, %v162
    %v164 = vrot.slane %v163, 2
    %v165 = vadd.f32 %v163, %v164
    %v166 = vrot.slane %v165, 1
    %v167 = vadd.f32 %v165, %v166
    %v168 = vsel %vm140, %v160, 0.0
    %v169 = vrot.slane %v168, 4
    %v170 = vadd.f32 %v168, %v169
    %v171 = vrot.slane %v170, 2
    %v172 = vadd.f32 %v170, %v171
    %v173 = vrot.slane %v172, 1
    %v174 = vadd.f32 %v172, %v173
    %v176 = vsel %vm140, %v158, 0
    %v179 = vsel %vm140, %v160, 0
    %vm181 = vcmask 1043456
    %v183 = vsel %vm181, %v101, 0
    %185 = vmatpush.msra.mxu0 0.0
    %186 = vmatpush.msra.mxu0 0.0
    %187 = vmatpush.msra.mxu0 0.0
    %188 = vmatpush.msra.mxu0 0.0
    %189 = vmatpush.msra.mxu0 0.0
    %190 = vmatpush.msra.mxu0 0.0
    %191 = vmatpush.msra.mxu0 0.0
    %192 = vmatpush.msra.mxu0 0.0
    %193 = vmatpush.msra.mxu0 0.0
    %194 = vmatpush.msra.mxu0 0.0
    %195 = vmatpush.msra.mxu0 0.0
    %196 = vmatpush.msra.mxu0 0.0
    %197 = vmatpush.msra.mxu0 0.0
    %198 = vmatpush.msra.mxu0 0.0
    %199 = vmatpush.msra.mxu0 0.0
    %200 = vmatpush.msra.mxu0 %v183
    %201 = vmatmul.f32.gmra.mxu0 %v176
    %v202 = vpop.f32.mrf.mxu0
    %v203 = vadd.f32 0.0, %v202
    %204 = vmatmul.f32.gmra.mxu0 %v179
    %v205 = vpop.f32.mrf.mxu0
    %v206 = vadd.f32 0.0, %v205
    %207 = vdwg.mxu0
    %210 = vrot.lane.b32.xlu0 %v58, 64
    %v211 = vpop.permute.xlu0 %210
    %212 = vrot.lane.b32.xlu0 %v61, 64
    %v213 = vpop.permute.xlu0 %212
    %v216 = vmul.f32 %v203, %v211
    %v217 = vmul.f32 %v206, %v213
    %v218 = vsel %vm110, %v216, 0.0
    %v219 = vrot.slane %v218, 4
    %v220 = vadd.f32 %v218, %v219
    %v221 = vrot.slane %v220, 2
    %v222 = vadd.f32 %v220, %v221
    %v223 = vrot.slane %v222, 1
    %v224 = vadd.f32 %v222, %v223
    %v225 = vsel %vm110, %v217, 0.0
    %v226 = vrot.slane %v225, 4
    %v227 = vadd.f32 %v225, %v226
    %v228 = vrot.slane %v227, 2
    %v229 = vadd.f32 %v227, %v228
    %v230 = vrot.slane %v229, 1
    %v231 = vadd.f32 %v229, %v230
    %v232 = vrcp.pop %v167
    %v233 = vmul.f32 %v167, %v232
    %v234 = vsub.f32 1.0, %v233
    %v235 = vmul.f32 %v232, %v234
    %v236 = vadd.f32 %v232, %v235
    %vm237 = vweird.f32 %v167
    %vm238 = vweird.f32 %v232
    %vm239 = vmor %vm237, %vm238
    %v240 = vsel %vm239, %v232, %v236
    %v241 = vand.u32 2147483647, %v167
    %vm242 = vcmp.eq.f32.partialorder %v241, 8.507059e+37
    %v243 = vand.u32 %v167, 2147483648
    %v244 = vor.u32 1.1754944e-38, %v243
    %v245 = vsel %vm242, %v244, %v240
    %v246 = vmul.f32 1.0, %v245
    %v247 = vrcp.pop %v174
    %v248 = vmul.f32 %v174, %v247
    %v249 = vsub.f32 1.0, %v248
    %v250 = vmul.f32 %v247, %v249
    %v251 = vadd.f32 %v247, %v250
    %vm252 = vweird.f32 %v174
    %vm253 = vweird.f32 %v247
    %vm254 = vmor %vm252, %vm253
    %v255 = vsel %vm254, %v247, %v251
    %v256 = vand.u32 2147483647, %v174
    %vm257 = vcmp.eq.f32.partialorder %v256, 8.507059e+37
    %v258 = vand.u32 %v174, 2147483648
    %v259 = vor.u32 1.1754944e-38, %v258
    %v260 = vsel %vm257, %v259, %v255
    %v261 = vmul.f32 1.0, %v260
    %v264 = vsel %vm69, %v261, %v246
    %v265 = vsel %vm140, %v264, 0
    %267 = vmatpush.msra.mxu0 0.0
    %268 = vmatpush.msra.mxu0 0.0
    %269 = vmatpush.msra.mxu0 0.0
    %270 = vmatpush.msra.mxu0 0.0
    %271 = vmatpush.msra.mxu0 0.0
    %272 = vmatpush.msra.mxu0 0.0
    %273 = vmatpush.msra.mxu0 0.0
    %274 = vmatpush.msra.mxu0 0.0
    %275 = vmatpush.msra.mxu0 0.0
    %276 = vmatpush.msra.mxu0 0.0
    %277 = vmatpush.msra.mxu0 0.0
    %278 = vmatpush.msra.mxu0 0.0
    %279 = vmatpush.msra.mxu0 0.0
    %280 = vmatpush.msra.mxu0 0.0
    %281 = vmatpush.msra.mxu0 0.0
    %282 = vmatpush.msra.mxu0 %v183
    %283 = vmatmul.f32.gmra.mxu0 %v265
    %v284 = vpop.f32.mrf.mxu0
    %v285 = vadd.f32 0.0, %v284
    %286 = vdwg.mxu0
    %v288 = vrot.slane %v285, 1
    %v291 = vmul.f32 %v224, %v285
    %v292 = vmul.f32 %v231, %v288
    %v293 = vld [vmem:[%s3] sm:$0xff]
    %v294 = vld [vmem:[%s3 + $0x8] sm:$0xff]
    %v295 = vld [vmem:[%s3 + $0x10] sm:$0xff]
    %v296 = vld [vmem:[%s3 + $0x18] sm:$0xff]
    %v297 = vld [vmem:[%s3 + $0x20] sm:$0xff]
    %v298 = vld [vmem:[%s3 + $0x28] sm:$0xff]
    %v299 = vld [vmem:[%s3 + $0x30] sm:$0xff]
    %v300 = vld [vmem:[%s3 + $0x38] sm:$0xff]
    %v301 = vld [vmem:[%s4] sm:$0x1]
    %v303 = vperm.slane %v301, 0
    %v307 = vrot.slane %v292, 7
    %v308 = vsel %vm69, %v307, %v291
    %v309 = vsel %vm110, %v308, 0
    %311 = vmatpush.msra.mxu0 0.0
    %312 = vmatpush.msra.mxu0 0.0
    %313 = vmatpush.msra.mxu0 0.0
    %314 = vmatpush.msra.mxu0 0.0
    %315 = vmatpush.msra.mxu0 0.0
    %316 = vmatpush.msra.mxu0 0.0
    %317 = vmatpush.msra.mxu0 0.0
    %318 = vmatpush.msra.mxu0 0.0
    %319 = vmatpush.msra.mxu0 %v300
    %320 = vmatpush.msra.mxu0 %v299
    %321 = vmatpush.msra.mxu0 %v298
    %322 = vmatpush.msra.mxu0 %v297
    %323 = vmatpush.msra.mxu0 %v296
    %324 = vmatpush.msra.mxu0 %v295
    %325 = vmatpush.msra.mxu0 %v294
    %326 = vmatpush.msra.mxu0 %v293
    %327 = vmatmul.f32.gmra.mxu0 %v309
    %v328 = vpop.f32.mrf.mxu0
    %v329 = vadd.f32 %v303, %v328
    %330 = vdwg.mxu0
    %vm331 = vcmask 254976
    %332 = vst.msk [vmem:[#allocation2] sm:$0x3] %vm331, %v329
    // Predicated region
    $region30: #{tpu_custom_call.1} parent=1 // pred_check
      _
    $region31: #{tpu_custom_call.1} parent=1 // pred_check_branch
      %334 = sbr.rel (0) target = $region33
    $region32: #{tpu_custom_call.1} parent=1 // pred_region
      %336 = vsyncadd [#allocation3], 0
      %s338 = sshll.u32 [#allocation2], 4
      %s339 = int_to_ptr.vmem [resolvable:$true] %s338
      %s340 = sshll.u32 %s7, 4
      %s341 = int_to_ptr.hbm [resolvable:$true] %s340
      %343 = dma.vmem_to_hbm [thread:$0]  %s339, 32, %s341, [#allocation3]
    $region33: #{tpu_custom_call.1} parent=1 // pred_fallthru
      _
    // Predicated region
    $region34: #{tpu_custom_call.1} parent=1 // pred_check
      _
    $region35: #{tpu_custom_call.1} parent=1 // pred_check_branch
      %345 = sbr.rel (0) target = $region37
    $region36: #{tpu_custom_call.1} parent=1 // pred_region
      %347 = dma.done [#allocation3], 32
    $region37: #{tpu_custom_call.1} parent=1 // pred_fallthru
      _
    %348 = vsyncpa [#allocation3], 1

</llo_original>
